<compile_context>
chip_gen: v7x
topology: tpu7x:2x2x1
jax: 0.10.0
libtpu: 0.0.40
codegen_flags: <defaults>
</compile_context>

<pallas_src>
import functools

import jax
import jax.numpy as jnp
from jax.experimental import pallas as pl
from jax.experimental.pallas import tpu as pltpu

LANE = 128


def _round_up(n, m):
    return ((n + m - 1) // m) * m


# ---------------------------------------------------------------------------
# Pallas kernel: fused 5-layer MLP  (Linear -> SiLU) x4 -> Linear
# Weights arrive pre-transposed (in, out_pad=128k) in bf16; biases are f32 (1, out_pad).
# ---------------------------------------------------------------------------
def _mlp_kernel(x_ref,
                w1_ref, b1_ref,
                w2_ref, b2_ref,
                w3_ref, b3_ref,
                w4_ref, b4_ref,
                w5_ref, b5_ref,
                o_ref):
    def silu(z):
        # z * sigmoid(z) == 0.5 * z * (tanh(0.5 z) + 1): a single EUP transcendental, exact.
        return 0.5 * z * (jnp.tanh(0.5 * z) + 1.0)

    def layer(h, w_ref, b_ref):
        # bf16 operands on the MXU, f32 accumulate; bias/activation math stays f32.
        return jnp.dot(h.astype(jnp.bfloat16), w_ref[...],
                       preferred_element_type=jnp.float32) + b_ref[...]

    h = x_ref[...]                       # (bm, in_dim) f32, real (unpadded) K
    h = silu(layer(h, w1_ref, b1_ref))   # (bm, 128)
    h = silu(layer(h, w2_ref, b2_ref))   # (bm, 128)  (real 64 cols, rest exactly 0)
    h = silu(layer(h, w3_ref, b3_ref))   # (bm, 128)  (real 32 cols)
    h = silu(layer(h, w4_ref, b4_ref))   # (bm, 128)  (real 16 cols)
    o_ref[...] = layer(h, w5_ref, b5_ref).astype(o_ref.dtype)


# ---------------------------------------------------------------------------
# One-time parameter layout: transpose to (in, out), zero-pad to 128 lanes, cast W to bf16.
# Zero padding is exactly preserved layer to layer because silu(0) == 0.
# ---------------------------------------------------------------------------
def prepare_params(weights, biases):
    wts, bts = [], []
    for li, (w, b) in enumerate(zip(weights, biases)):
        o, i = w.shape
        i_pad = i if li == 0 else _round_up(i, LANE)   # first layer keeps the real K (= input_dim)
        o_pad = _round_up(o, LANE)
        wt = jnp.zeros((i_pad, o_pad), jnp.float32).at[:i, :o].set(w.T).astype(jnp.bfloat16)
        bt = jnp.zeros((1, o_pad), jnp.float32).at[:, :o].set(b.reshape(1, o))
        wts.append(wt)
        bts.append(bt)
    return tuple(wts), tuple(bts)


# ---------------------------------------------------------------------------
# Jitted forward on prepared params.
# ---------------------------------------------------------------------------
@functools.partial(jax.jit, static_argnums=(3,))
def _forward_prepared(x, wts, bts, out_dim):
    B, in_dim = x.shape
    out_pad = wts[-1].shape[1]

    # Batch tile: as large as reasonable (amortize ~0.35us/step + pipeline fill/drain), but split
    # into >= 2 grid steps whenever possible so the "parallel" axis shards across v7x's 2 TCs
    # (no-op on 1-TC v5e/v6e).
    B8 = _round_up(B, 8)
    bm = min(B8, 1024)
    if B8 >= 16:
        bm = min(bm, _round_up((B8 + 1) // 2, 8))
    B_pad = _round_up(B, bm)

    x_in = x if B_pad == B else jnp.zeros((B_pad, in_dim), x.dtype).at[:B].set(x)

    # x / out tiles march along the batch axis; weights & biases are whole-array blocks with a
    # constant index_map so they stay resident in VMEM across all grid steps.
    in_specs = [pl.BlockSpec((bm, in_dim), lambda i: (i, 0))]
    args = [x_in]
    for wt, bt in zip(wts, bts):
        in_specs.append(pl.BlockSpec(wt.shape, lambda i: (0, 0)))
        in_specs.append(pl.BlockSpec(bt.shape, lambda i: (0, 0)))
        args.append(wt)
        args.append(bt)

    out_padded = pl.pallas_call(
        _mlp_kernel,
        out_shape=jax.ShapeDtypeStruct((B_pad, out_pad), jnp.float32),
        grid=(B_pad // bm,),
        in_specs=in_specs,
        out_specs=pl.BlockSpec((bm, out_pad), lambda i: (i, 0)),
        compiler_params=pltpu.CompilerParams(
            dimension_semantics=("parallel",),   # megacore batch sharding on v7x
        ),
    )(*args)

    # TODO(synk): this slice is an extra HBM pass over the (B_pad, 128) padded output; let the
    # consumer read the padded array directly (or fuse the slice) if it matters at large B.
    return out_padded[:B, :out_dim]


def bayesian_regressor_forward(x, weights, biases):
    """x: (B, input_dim) f32.  weights[i]: (out_i, in_i) (PyTorch convention).  biases[i]: (out_i,)."""
    out_dim = weights[-1].shape[0]
    wts, bts = prepare_params(weights, biases)
    return _forward_prepared(x, wts, bts, out_dim)


# ---------------------------------------------------------------------------
# Parameter construction (deterministic, blitz-style reparameterized sample)
# ---------------------------------------------------------------------------
def make_bayesian_linear_params(key, in_dim, out_dim,
                                posterior_mu_init=0.0, posterior_rho_init=-7.0):
    """One sampled BayesianLinear layer:  W = mu + softplus(rho) * eps  (PyTorch (out,in) layout)."""
    k_wmu, k_weps, k_bmu, k_beps = jax.random.split(key, 4)
    w_mu = posterior_mu_init + 0.1 * jax.random.normal(k_wmu, (out_dim, in_dim), jnp.float32)
    w_rho = jnp.full((out_dim, in_dim), posterior_rho_init, jnp.float32)
    w_eps = jax.random.normal(k_weps, (out_dim, in_dim), jnp.float32)
    w = w_mu + jax.nn.softplus(w_rho) * w_eps

    b_mu = posterior_mu_init + 0.1 * jax.random.normal(k_bmu, (out_dim,), jnp.float32)
    b_rho = jnp.full((out_dim,), posterior_rho_init, jnp.float32)
    b_eps = jax.random.normal(k_beps, (out_dim,), jnp.float32)
    b = b_mu + jax.nn.softplus(b_rho) * b_eps
    return w, b


def make_regressor_params(key, input_dim, output_dim):
    dims = [input_dim, 128, 64, 32, 16, output_dim]
    keys = jax.random.split(key, 5)
    weights, biases = [], []
    for i in range(5):
        w, b = make_bayesian_linear_params(keys[i], dims[i], dims[i + 1])
        weights.append(w)
        biases.append(b)
    return weights, biases


# ---------------------------------------------------------------------------
# Pure-JAX f32 reference (exact SiLU, f32 matmuls) for a sanity check
# ---------------------------------------------------------------------------
def reference_forward(x, weights, biases):
    h = x
    for i, (w, b) in enumerate(zip(weights, biases)):
        h = h @ w.T + b.reshape(1, -1)
        if i < 4:
            h = jax.nn.silu(h)
    return h


if __name__ == "__main__":
    key = jax.random.PRNGKey(0)
    k_params, k_x, k_x2, k_x3 = jax.random.split(key, 4)

    batch = 8
    input_dim = 16
    output_dim = 1

    weights, biases = make_regressor_params(k_params, input_dim, output_dim)

    # bf16 matmul operands (f32 accumulate) -> compare against the f32 reference with a loose tol.
    TOL = dict(atol=2e-2, rtol=2e-2)

    # Small-shape check (single tile).
    x = jax.random.normal(k_x, (batch, input_dim), jnp.float32)
    out = jax.block_until_ready(bayesian_regressor_forward(x, weights, biases))
    ref = reference_forward(x, weights, biases)
    assert out.shape == (batch, output_dim)
    assert jnp.allclose(out, ref, **TOL), (out, ref)

    # Multi-tile check (exercises the batch grid / resident-weights / 2-step v7x path).
    x2 = jax.random.normal(k_x2, (1024, input_dim), jnp.float32)
    out2 = jax.block_until_ready(bayesian_regressor_forward(x2, weights, biases))
    ref2 = reference_forward(x2, weights, biases)
    assert out2.shape == (1024, output_dim)
    assert jnp.allclose(out2, ref2, **TOL)

    # Ragged-batch check (exercises row zero-padding of the input tile).
    x3 = jax.random.normal(k_x3, (20, input_dim), jnp.float32)
    out3 = jax.block_until_ready(bayesian_regressor_forward(x3, weights, biases))
    ref3 = reference_forward(x3, weights, biases)
    assert out3.shape == (20, output_dim)
    assert jnp.allclose(out3, ref3, **TOL)

    print("KERNEL_OK")
</pallas_src>

<mosaic_0001>
module attributes {stable_mosaic.version = 11 : i64} {
  func.func @_mlp_kernel(%arg0: i32, %arg1: memref<8x16xf32, #tpu.memory_space<vmem>>, %arg2: memref<16x128xbf16, #tpu.memory_space<vmem>>, %arg3: memref<1x128xf32, #tpu.memory_space<vmem>>, %arg4: memref<128x128xbf16, #tpu.memory_space<vmem>>, %arg5: memref<1x128xf32, #tpu.memory_space<vmem>>, %arg6: memref<128x128xbf16, #tpu.memory_space<vmem>>, %arg7: memref<1x128xf32, #tpu.memory_space<vmem>>, %arg8: memref<128x128xbf16, #tpu.memory_space<vmem>>, %arg9: memref<1x128xf32, #tpu.memory_space<vmem>>, %arg10: memref<128x128xbf16, #tpu.memory_space<vmem>>, %arg11: memref<1x128xf32, #tpu.memory_space<vmem>>, %arg12: memref<8x128xf32, #tpu.memory_space<vmem>>) attributes {dimension_semantics = [#tpu.dimension_semantics<parallel>], iteration_bounds = array<i64: 1>, scalar_prefetch = 0 : i64, scratch_operands = 0 : i64, tpu.core_type = #tpu.core_type<tc>, window_params = [{transform_indices = @transform_0, window_bounds = array<i64: 8, 16>}, {pipeline_mode = #tpu.pipeline_mode<synchronous>, transform_indices = @transform_1, window_bounds = array<i64: 16, 128>}, {pipeline_mode = #tpu.pipeline_mode<synchronous>, transform_indices = @transform_2, window_bounds = array<i64: 1, 128>}, {pipeline_mode = #tpu.pipeline_mode<synchronous>, transform_indices = @transform_3, window_bounds = array<i64: 128, 128>}, {pipeline_mode = #tpu.pipeline_mode<synchronous>, transform_indices = @transform_4, window_bounds = array<i64: 1, 128>}, {pipeline_mode = #tpu.pipeline_mode<synchronous>, transform_indices = @transform_5, window_bounds = array<i64: 128, 128>}, {pipeline_mode = #tpu.pipeline_mode<synchronous>, transform_indices = @transform_6, window_bounds = array<i64: 1, 128>}, {pipeline_mode = #tpu.pipeline_mode<synchronous>, transform_indices = @transform_7, window_bounds = array<i64: 128, 128>}, {pipeline_mode = #tpu.pipeline_mode<synchronous>, transform_indices = @transform_8, window_bounds = array<i64: 1, 128>}, {pipeline_mode = #tpu.pipeline_mode<synchronous>, transform_indices = @transform_9, window_bounds = array<i64: 128, 128>}, {pipeline_mode = #tpu.pipeline_mode<synchronous>, transform_indices = @transform_10, window_bounds = array<i64: 1, 128>}, {transform_indices = @transform_11, window_bounds = array<i64: 8, 128>}]} {
    %c0 = arith.constant 0 : index
    %c0_0 = arith.constant 0 : index
    %0 = vector.load %arg1[%c0, %c0_0] : memref<8x16xf32, #tpu.memory_space<vmem>>, vector<8x16xf32>
    %1 = arith.truncf %0 : vector<8x16xf32> to vector<8x16xbf16>
    %c0_1 = arith.constant 0 : index
    %c0_2 = arith.constant 0 : index
    %2 = vector.load %arg2[%c0_1, %c0_2] : memref<16x128xbf16, #tpu.memory_space<vmem>>, vector<16x128xbf16>
    %cst = arith.constant dense<0.000000e+00> : vector<8x128xf32>
    %3 = tpu.matmul %1, %2, %cst {dimension_numbers = #tpu.dot_dimension_numbers<[1], [0], [0], [1], [0, 0, 1, 1], [], []>} : vector<8x16xbf16>, vector<16x128xbf16>, vector<8x128xf32> -> vector<8x128xf32>
    %c0_3 = arith.constant 0 : index
    %c0_4 = arith.constant 0 : index
    %4 = vector.load %arg3[%c0_3, %c0_4] : memref<1x128xf32, #tpu.memory_space<vmem>>, vector<1x128xf32>
    %5 = vector.broadcast %4 : vector<1x128xf32> to vector<8x128xf32>
    %6 = arith.addf %3, %5 : vector<8x128xf32>
    %cst_5 = arith.constant 5.000000e-01 : f32
    %7 = vector.broadcast %cst_5 : f32 to vector<8x128xf32>
    %8 = arith.mulf %7, %6 : vector<8x128xf32>
    %cst_6 = arith.constant 5.000000e-01 : f32
    %9 = vector.broadcast %cst_6 : f32 to vector<8x128xf32>
    %10 = arith.mulf %9, %6 : vector<8x128xf32>
    %11 = math.tanh %10 : vector<8x128xf32>
    %cst_7 = arith.constant 1.000000e+00 : f32
    %12 = vector.broadcast %cst_7 : f32 to vector<8x128xf32>
    %13 = arith.addf %11, %12 : vector<8x128xf32>
    %14 = arith.mulf %8, %13 : vector<8x128xf32>
    %15 = arith.truncf %14 : vector<8x128xf32> to vector<8x128xbf16>
    %c0_8 = arith.constant 0 : index
    %c0_9 = arith.constant 0 : index
    %16 = vector.load %arg4[%c0_8, %c0_9] : memref<128x128xbf16, #tpu.memory_space<vmem>>, vector<128x128xbf16>
    %cst_10 = arith.constant dense<0.000000e+00> : vector<8x128xf32>
    %17 = tpu.matmul %15, %16, %cst_10 {dimension_numbers = #tpu.dot_dimension_numbers<[1], [0], [0], [1], [0, 0, 1, 1], [], []>} : vector<8x128xbf16>, vector<128x128xbf16>, vector<8x128xf32> -> vector<8x128xf32>
    %c0_11 = arith.constant 0 : index
    %c0_12 = arith.constant 0 : index
    %18 = vector.load %arg5[%c0_11, %c0_12] : memref<1x128xf32, #tpu.memory_space<vmem>>, vector<1x128xf32>
    %19 = vector.broadcast %18 : vector<1x128xf32> to vector<8x128xf32>
    %20 = arith.addf %17, %19 : vector<8x128xf32>
    %cst_13 = arith.constant 5.000000e-01 : f32
    %21 = vector.broadcast %cst_13 : f32 to vector<8x128xf32>
    %22 = arith.mulf %21, %20 : vector<8x128xf32>
    %cst_14 = arith.constant 5.000000e-01 : f32
    %23 = vector.broadcast %cst_14 : f32 to vector<8x128xf32>
    %24 = arith.mulf %23, %20 : vector<8x128xf32>
    %25 = math.tanh %24 : vector<8x128xf32>
    %cst_15 = arith.constant 1.000000e+00 : f32
    %26 = vector.broadcast %cst_15 : f32 to vector<8x128xf32>
    %27 = arith.addf %25, %26 : vector<8x128xf32>
    %28 = arith.mulf %22, %27 : vector<8x128xf32>
    %29 = arith.truncf %28 : vector<8x128xf32> to vector<8x128xbf16>
    %c0_16 = arith.constant 0 : index
    %c0_17 = arith.constant 0 : index
    %30 = vector.load %arg6[%c0_16, %c0_17] : memref<128x128xbf16, #tpu.memory_space<vmem>>, vector<128x128xbf16>
    %cst_18 = arith.constant dense<0.000000e+00> : vector<8x128xf32>
    %31 = tpu.matmul %29, %30, %cst_18 {dimension_numbers = #tpu.dot_dimension_numbers<[1], [0], [0], [1], [0, 0, 1, 1], [], []>} : vector<8x128xbf16>, vector<128x128xbf16>, vector<8x128xf32> -> vector<8x128xf32>
    %c0_19 = arith.constant 0 : index
    %c0_20 = arith.constant 0 : index
    %32 = vector.load %arg7[%c0_19, %c0_20] : memref<1x128xf32, #tpu.memory_space<vmem>>, vector<1x128xf32>
    %33 = vector.broadcast %32 : vector<1x128xf32> to vector<8x128xf32>
    %34 = arith.addf %31, %33 : vector<8x128xf32>
    %cst_21 = arith.constant 5.000000e-01 : f32
    %35 = vector.broadcast %cst_21 : f32 to vector<8x128xf32>
    %36 = arith.mulf %35, %34 : vector<8x128xf32>
    %cst_22 = arith.constant 5.000000e-01 : f32
    %37 = vector.broadcast %cst_22 : f32 to vector<8x128xf32>
    %38 = arith.mulf %37, %34 : vector<8x128xf32>
    %39 = math.tanh %38 : vector<8x128xf32>
    %cst_23 = arith.constant 1.000000e+00 : f32
    %40 = vector.broadcast %cst_23 : f32 to vector<8x128xf32>
    %41 = arith.addf %39, %40 : vector<8x128xf32>
    %42 = arith.mulf %36, %41 : vector<8x128xf32>
    %43 = arith.truncf %42 : vector<8x128xf32> to vector<8x128xbf16>
    %c0_24 = arith.constant 0 : index
    %c0_25 = arith.constant 0 : index
    %44 = vector.load %arg8[%c0_24, %c0_25] : memref<128x128xbf16, #tpu.memory_space<vmem>>, vector<128x128xbf16>
    %cst_26 = arith.constant dense<0.000000e+00> : vector<8x128xf32>
    %45 = tpu.matmul %43, %44, %cst_26 {dimension_numbers = #tpu.dot_dimension_numbers<[1], [0], [0], [1], [0, 0, 1, 1], [], []>} : vector<8x128xbf16>, vector<128x128xbf16>, vector<8x128xf32> -> vector<8x128xf32>
    %c0_27 = arith.constant 0 : index
    %c0_28 = arith.constant 0 : index
    %46 = vector.load %arg9[%c0_27, %c0_28] : memref<1x128xf32, #tpu.memory_space<vmem>>, vector<1x128xf32>
    %47 = vector.broadcast %46 : vector<1x128xf32> to vector<8x128xf32>
    %48 = arith.addf %45, %47 : vector<8x128xf32>
    %cst_29 = arith.constant 5.000000e-01 : f32
    %49 = vector.broadcast %cst_29 : f32 to vector<8x128xf32>
    %50 = arith.mulf %49, %48 : vector<8x128xf32>
    %cst_30 = arith.constant 5.000000e-01 : f32
    %51 = vector.broadcast %cst_30 : f32 to vector<8x128xf32>
    %52 = arith.mulf %51, %48 : vector<8x128xf32>
    %53 = math.tanh %52 : vector<8x128xf32>
    %cst_31 = arith.constant 1.000000e+00 : f32
    %54 = vector.broadcast %cst_31 : f32 to vector<8x128xf32>
    %55 = arith.addf %53, %54 : vector<8x128xf32>
    %56 = arith.mulf %50, %55 : vector<8x128xf32>
    %57 = arith.truncf %56 : vector<8x128xf32> to vector<8x128xbf16>
    %c0_32 = arith.constant 0 : index
    %c0_33 = arith.constant 0 : index
    %58 = vector.load %arg10[%c0_32, %c0_33] : memref<128x128xbf16, #tpu.memory_space<vmem>>, vector<128x128xbf16>
    %cst_34 = arith.constant dense<0.000000e+00> : vector<8x128xf32>
    %59 = tpu.matmul %57, %58, %cst_34 {dimension_numbers = #tpu.dot_dimension_numbers<[1], [0], [0], [1], [0, 0, 1, 1], [], []>} : vector<8x128xbf16>, vector<128x128xbf16>, vector<8x128xf32> -> vector<8x128xf32>
    %c0_35 = arith.constant 0 : index
    %c0_36 = arith.constant 0 : index
    %60 = vector.load %arg11[%c0_35, %c0_36] : memref<1x128xf32, #tpu.memory_space<vmem>>, vector<1x128xf32>
    %61 = vector.broadcast %60 : vector<1x128xf32> to vector<8x128xf32>
    %62 = arith.addf %59, %61 : vector<8x128xf32>
    %c0_37 = arith.constant 0 : index
    %c0_38 = arith.constant 0 : index
    %63 = vector.load %arg12[%c0_37, %c0_38] : memref<8x128xf32, #tpu.memory_space<vmem>>, vector<8x128xf32>
    tpu.vector_store %arg12[%c0_37, %c0_38], %62 {strides = array<i32>} : memref<8x128xf32, #tpu.memory_space<vmem>>, vector<8x128xf32>,
    return
  }
  func.func @transform_0(%arg0: i32) -> (i32, i32) {
    %c0_i32 = arith.constant 0 : i32
    %c0_i32_0 = arith.constant 0 : i32
    return %arg0, %c0_i32 : i32, i32
  }
  func.func @transform_1(%arg0: i32) -> (i32, i32) {
    %c0_i32 = arith.constant 0 : i32
    %c0_i32_0 = arith.constant 0 : i32
    %c0_i32_1 = arith.constant 0 : i32
    return %c0_i32, %c0_i32_0 : i32, i32
  }
  func.func @transform_2(%arg0: i32) -> (i32, i32) {
    %c0_i32 = arith.constant 0 : i32
    %c0_i32_0 = arith.constant 0 : i32
    %c0_i32_1 = arith.constant 0 : i32
    return %c0_i32, %c0_i32_0 : i32, i32
  }
  func.func @transform_3(%arg0: i32) -> (i32, i32) {
    %c0_i32 = arith.constant 0 : i32
    %c0_i32_0 = arith.constant 0 : i32
    %c0_i32_1 = arith.constant 0 : i32
    return %c0_i32, %c0_i32_0 : i32, i32
  }
  func.func @transform_4(%arg0: i32) -> (i32, i32) {
    %c0_i32 = arith.constant 0 : i32
    %c0_i32_0 = arith.constant 0 : i32
    %c0_i32_1 = arith.constant 0 : i32
    return %c0_i32, %c0_i32_0 : i32, i32
  }
  func.func @transform_5(%arg0: i32) -> (i32, i32) {
    %c0_i32 = arith.constant 0 : i32
    %c0_i32_0 = arith.constant 0 : i32
    %c0_i32_1 = arith.constant 0 : i32
    return %c0_i32, %c0_i32_0 : i32, i32
  }
  func.func @transform_6(%arg0: i32) -> (i32, i32) {
    %c0_i32 = arith.constant 0 : i32
    %c0_i32_0 = arith.constant 0 : i32
    %c0_i32_1 = arith.constant 0 : i32
    return %c0_i32, %c0_i32_0 : i32, i32
  }
  func.func @transform_7(%arg0: i32) -> (i32, i32) {
    %c0_i32 = arith.constant 0 : i32
    %c0_i32_0 = arith.constant 0 : i32
    %c0_i32_1 = arith.constant 0 : i32
    return %c0_i32, %c0_i32_0 : i32, i32
  }
  func.func @transform_8(%arg0: i32) -> (i32, i32) {
    %c0_i32 = arith.constant 0 : i32
    %c0_i32_0 = arith.constant 0 : i32
    %c0_i32_1 = arith.constant 0 : i32
    return %c0_i32, %c0_i32_0 : i32, i32
  }
  func.func @transform_9(%arg0: i32) -> (i32, i32) {
    %c0_i32 = arith.constant 0 : i32
    %c0_i32_0 = arith.constant 0 : i32
    %c0_i32_1 = arith.constant 0 : i32
    return %c0_i32, %c0_i32_0 : i32, i32
  }
  func.func @transform_10(%arg0: i32) -> (i32, i32) {
    %c0_i32 = arith.constant 0 : i32
    %c0_i32_0 = arith.constant 0 : i32
    %c0_i32_1 = arith.constant 0 : i32
    return %c0_i32, %c0_i32_0 : i32, i32
  }
  func.func @transform_11(%arg0: i32) -> (i32, i32) {
    %c0_i32 = arith.constant 0 : i32
    %c0_i32_0 = arith.constant 0 : i32
    return %arg0, %c0_i32 : i32, i32
  }
}

</mosaic_0001>

<llo_original>
// kernel: _forward_prepared.1
$region0: #{_forward_prepared.1}
  #allocation0 [shape = 'u32[]', space=smem, size = 0x4, offset = 0x4, fixed_abs, tag = 'smem constant byte address 0x4 - core index']
  #allocation1 [shape = 'u32[144,128]{1,0:T(1,128)}', space=vmem, size = 0x12000, scoped, tag = 'internal scratch']
  %s0 = inlined_call_operand.hbm [shape: f32[8,16], index: 0, kind: input, shape index: {}]
  %s1 = inlined_call_operand.hbm [shape: bf16[16,128], index: 1, kind: input, shape index: {}]
  %s2 = inlined_call_operand.vmem [shape: f32[1,128], index: 2, kind: input, shape index: {}]
  %s3 = inlined_call_operand.hbm [shape: bf16[128,128], index: 3, kind: input, shape index: {}]
  %s4 = inlined_call_operand.vmem [shape: f32[1,128], index: 4, kind: input, shape index: {}]
  %s5 = inlined_call_operand.hbm [shape: bf16[128,128], index: 5, kind: input, shape index: {}]
  %s6 = inlined_call_operand.vmem [shape: f32[1,128], index: 6, kind: input, shape index: {}]
  %s7 = inlined_call_operand.hbm [shape: bf16[128,128], index: 7, kind: input, shape index: {}]
  %s8 = inlined_call_operand.vmem [shape: f32[1,128], index: 8, kind: input, shape index: {}]
  %s9 = inlined_call_operand.hbm [shape: bf16[128,128], index: 9, kind: input, shape index: {}]
  %s10 = inlined_call_operand.vmem [shape: f32[1,128], index: 10, kind: input, shape index: {}]
  %s11 = inlined_call_operand.vmem [shape: f32[8,128], index: 11, kind: output, shape index: {}]
  %s12 = sld [smem:[#allocation0]]
  $region78: #{_forward_prepared.1} parent=0
    _
  %s14 = ssub.s32 1, %s12
  %s15 = scalar_select 0, %s14, %s12
  $region1: #{_forward_prepared.1} parent=0
    #allocation2 [shape = 'u8[4096]{0}', space=vmem, size = 0x1000, scoped, tag = 'input window, operand 0, single buffered']
    #allocation3 [shape = 's32[1]{0}', space=sflag, size = 0x4, scoped, tag = 'scoped memory for _forward_prepared.1']
    #allocation4 [shape = 'u8[4096]{0}', space=vmem, size = 0x1000, scoped, tag = 'input window, operand 1, single buffered']
    #allocation5 [shape = 's32[1]{0}', space=sflag, size = 0x4, scoped, tag = 'scoped memory for _forward_prepared.1']
    #allocation6 [shape = 'u8[32768]{0}', space=vmem, size = 0x8000, scoped, tag = 'input window, operand 3, single buffered']
    #allocation7 [shape = 'u8[32768]{0}', space=vmem, size = 0x8000, scoped, tag = 'input window, operand 5, single buffered']
    #allocation8 [shape = 's32[1]{0}', space=sflag, size = 0x4, scoped, tag = 'scoped memory for _forward_prepared.1']
    #allocation9 [shape = 'u8[32768]{0}', space=vmem, size = 0x8000, scoped, tag = 'input window, operand 7, single buffered']
    #allocation10 [shape = 'u8[32768]{0}', space=vmem, size = 0x8000, scoped, tag = 'input window, operand 9, single buffered']
    #allocation11 [shape = 's32[1]{0}', space=sflag, size = 0x4, scoped, tag = 'scoped memory for _forward_prepared.1']
    %16 = vsyncpa [#allocation3], 0
    %17 = vsyncpa [#allocation5], 0
    %18 = vsyncpa [#allocation8], 0
    %19 = vsyncpa [#allocation11], 0
    // Predicated region
    $region2: #{_forward_prepared.1} parent=1 // pred_check
      _
    $region3: #{_forward_prepared.1} parent=1 // pred_check_branch
      %21 = sbr.rel (0) target = $region5
    $region4: #{_forward_prepared.1} parent=1 // pred_region
      %s23 = ssub.s32 128, 128
      %24 = vsyncadd [#allocation3], %s23
      %s26 = sshll.u32 [#allocation2], 4
      %s27 = int_to_ptr.vmem [resolvable:$true] %s26
      %29 = dma.hbm_to_vmem [thread:$0]  %s0, 128, %s27, [#allocation3]
    $region5: #{_forward_prepared.1} parent=1 // pred_fallthru
      _
    // Predicated region
    $region6: #{_forward_prepared.1} parent=1 // pred_check
      _
    $region7: #{_forward_prepared.1} parent=1 // pred_check_branch
      %31 = sbr.rel (0) target = $region9
    $region8: #{_forward_prepared.1} parent=1 // pred_region
      %s33 = ssub.s32 128, 128
      %34 = vsyncadd [#allocation5], %s33
      %s35 = sshll.u32 [#allocation4], 4
      %s36 = int_to_ptr.vmem [resolvable:$true] %s35
      %41 = dma.hbm_to_vmem [thread:$0]  %s1, 128, %s36, [#allocation5], 64, 64, 4
    $region9: #{_forward_prepared.1} parent=1 // pred_fallthru
      _
    // Predicated region
    $region10: #{_forward_prepared.1} parent=1 // pred_check
      _
    $region11: #{_forward_prepared.1} parent=1 // pred_check_branch
      %43 = sbr.rel (0) target = $region13
    $region12: #{_forward_prepared.1} parent=1 // pred_region
      _
    $region13: #{_forward_prepared.1} parent=1 // pred_fallthru
      _
    // Predicated region
    $region14: #{_forward_prepared.1} parent=1 // pred_check
      _
    $region15: #{_forward_prepared.1} parent=1 // pred_check_branch
      %45 = sbr.rel (0) target = $region17
    $region16: #{_forward_prepared.1} parent=1 // pred_region
      %s47 = ssub.s32 1024, 1024
      %48 = vsyncadd [#allocation5], %s47
      %s49 = sshll.u32 [#allocation6], 4
      %s50 = int_to_ptr.vmem [resolvable:$true] %s49
      %55 = dma.hbm_to_vmem [thread:$0]  %s3, 1024, %s50, [#allocation5], 64, 64, 4
    $region17: #{_forward_prepared.1} parent=1 // pred_fallthru
      _
    // Predicated region
    $region18: #{_forward_prepared.1} parent=1 // pred_check
      _
    $region19: #{_forward_prepared.1} parent=1 // pred_check_branch
      %57 = sbr.rel (0) target = $region21
    $region20: #{_forward_prepared.1} parent=1 // pred_region
      _
    $region21: #{_forward_prepared.1} parent=1 // pred_fallthru
      _
    // Predicated region
    $region22: #{_forward_prepared.1} parent=1 // pred_check
      _
    $region23: #{_forward_prepared.1} parent=1 // pred_check_branch
      %59 = sbr.rel (0) target = $region25
    $region24: #{_forward_prepared.1} parent=1 // pred_region
      %s61 = ssub.s32 1024, 1024
      %62 = vsyncadd [#allocation8], %s61
      %s63 = sshll.u32 [#allocation7], 4
      %s64 = int_to_ptr.vmem [resolvable:$true] %s63
      %69 = dma.hbm_to_vmem [thread:$0]  %s5, 1024, %s64, [#allocation8], 64, 64, 4
    $region25: #{_forward_prepared.1} parent=1 // pred_fallthru
      _
    // Predicated region
    $region26: #{_forward_prepared.1} parent=1 // pred_check
      _
    $region27: #{_forward_prepared.1} parent=1 // pred_check_branch
      %71 = sbr.rel (0) target = $region29
    $region28: #{_forward_prepared.1} parent=1 // pred_region
      _
    $region29: #{_forward_prepared.1} parent=1 // pred_fallthru
      _
    // Predicated region
    $region30: #{_forward_prepared.1} parent=1 // pred_check
      _
    $region31: #{_forward_prepared.1} parent=1 // pred_check_branch
      %73 = sbr.rel (0) target = $region33
    $region32: #{_forward_prepared.1} parent=1 // pred_region
      %s75 = ssub.s32 1024, 1024
      %76 = vsyncadd [#allocation8], %s75
      %s77 = sshll.u32 [#allocation9], 4
      %s78 = int_to_ptr.vmem [resolvable:$true] %s77
      %83 = dma.hbm_to_vmem [thread:$0]  %s7, 1024, %s78, [#allocation8], 64, 64, 4
    $region33: #{_forward_prepared.1} parent=1 // pred_fallthru
      _
    // Predicated region
    $region34: #{_forward_prepared.1} parent=1 // pred_check
      _
    $region35: #{_forward_prepared.1} parent=1 // pred_check_branch
      %85 = sbr.rel (0) target = $region37
    $region36: #{_forward_prepared.1} parent=1 // pred_region
      _
    $region37: #{_forward_prepared.1} parent=1 // pred_fallthru
      _
    // Predicated region
    $region38: #{_forward_prepared.1} parent=1 // pred_check
      _
    $region39: #{_forward_prepared.1} parent=1 // pred_check_branch
      %87 = sbr.rel (0) target = $region41
    $region40: #{_forward_prepared.1} parent=1 // pred_region
      %s89 = ssub.s32 1024, 1024
      %90 = vsyncadd [#allocation11], %s89
      %s91 = sshll.u32 [#allocation10], 4
      %s92 = int_to_ptr.vmem [resolvable:$true] %s91
      %97 = dma.hbm_to_vmem [thread:$0]  %s9, 1024, %s92, [#allocation11], 64, 64, 4
    $region41: #{_forward_prepared.1} parent=1 // pred_fallthru
      _
    // Predicated region
    $region42: #{_forward_prepared.1} parent=1 // pred_check
      _
    $region43: #{_forward_prepared.1} parent=1 // pred_check_branch
      %99 = sbr.rel (0) target = $region45
    $region44: #{_forward_prepared.1} parent=1 // pred_region
      _
    $region45: #{_forward_prepared.1} parent=1 // pred_fallthru
      _
    // Predicated region
    $region46: #{_forward_prepared.1} parent=1 // pred_check
      _
    $region47: #{_forward_prepared.1} parent=1 // pred_check_branch
      %101 = sbr.rel (0) target = $region49
    $region48: #{_forward_prepared.1} parent=1 // pred_region
      %102 = dma.done [#allocation3], 128
    $region49: #{_forward_prepared.1} parent=1 // pred_fallthru
      _
    // Predicated region
    $region50: #{_forward_prepared.1} parent=1 // pred_check
      _
    $region51: #{_forward_prepared.1} parent=1 // pred_check_branch
      %104 = sbr.rel (0) target = $region53
    $region52: #{_forward_prepared.1} parent=1 // pred_region
      %105 = dma.done [#allocation5], 128
    $region53: #{_forward_prepared.1} parent=1 // pred_fallthru
      _
    // Predicated region
    $region54: #{_forward_prepared.1} parent=1 // pred_check
      _
    $region55: #{_forward_prepared.1} parent=1 // pred_check_branch
      %107 = sbr.rel (0) target = $region57
    $region56: #{_forward_prepared.1} parent=1 // pred_region
      %108 = dma.done [#allocation5], 1024
    $region57: #{_forward_prepared.1} parent=1 // pred_fallthru
      _
    // Predicated region
    $region58: #{_forward_prepared.1} parent=1 // pred_check
      _
    $region59: #{_forward_prepared.1} parent=1 // pred_check_branch
      %110 = sbr.rel (0) target = $region61
    $region60: #{_forward_prepared.1} parent=1 // pred_region
      %111 = dma.done [#allocation8], 1024
    $region61: #{_forward_prepared.1} parent=1 // pred_fallthru
      _
    // Predicated region
    $region62: #{_forward_prepared.1} parent=1 // pred_check
      _
    $region63: #{_forward_prepared.1} parent=1 // pred_check_branch
      %113 = sbr.rel (0) target = $region65
    $region64: #{_forward_prepared.1} parent=1 // pred_region
      %114 = dma.done [#allocation8], 1024
    $region65: #{_forward_prepared.1} parent=1 // pred_fallthru
      _
    // Predicated region
    $region66: #{_forward_prepared.1} parent=1 // pred_check
      _
    $region67: #{_forward_prepared.1} parent=1 // pred_check_branch
      %116 = sbr.rel (0) target = $region69
    $region68: #{_forward_prepared.1} parent=1 // pred_region
      %117 = dma.done [#allocation11], 1024
    $region69: #{_forward_prepared.1} parent=1 // pred_fallthru
      _
    %v119 = vld [vmem:[#allocation2] sm:$0xff]
    %v120 = vpack.c.bf16 %v119, %v119
    %v121 = vld [vmem:[#allocation4] sm:$0xf]
    %v122 = vld [vmem:[#allocation4 + $0x4] sm:$0xf]
    %v123 = vld [vmem:[%s2] sm:$0x1]
    %v125 = vlaneseq
    %v126 = vshrl.u32 %v125, 7
    %v127 = vsub.s32 0, %v126
    %v128 = vrot.slane %v123, %v127
    %v132 = vunpack.c.l.b16 %v121
    %v133 = vunpack.c.l.b16 %v122
    %v134 = vpack.c.b16 %v133, %v132
    %vm136 = vcmask 130048
    %v138 = vsel %vm136, %v120, 0
    %140 = vmatprep.subr.bf16.mxu0 0
    %141 = vmatpush1.bf16.msra.mxu0 %v134
    %142 = vmatprep.subr.bf16.mxu0 0
    %143 = vmatpush1.bf16.msra.mxu0 0
    %144 = vmatprep.subr.bf16.mxu0 0
    %145 = vmatpush1.bf16.msra.mxu0 0
    %146 = vmatprep.subr.bf16.mxu0 0
    %147 = vmatpush1.bf16.msra.mxu0 0
    %148 = vmatprep.subr.bf16.mxu0 0
    %149 = vmatpush1.bf16.msra.mxu0 0
    %150 = vmatprep.subr.bf16.mxu0 0
    %151 = vmatpush1.bf16.msra.mxu0 0
    %152 = vmatprep.subr.bf16.mxu0 0
    %153 = vmatpush1.bf16.msra.mxu0 0
    %154 = vmatprep.subr.bf16.mxu0 0
    %155 = vmatpush1.bf16.msra.mxu0 0
    %156 = vmatprep.subr.bf16.mxu0 0
    %157 = vmatpush1.bf16.msra.mxu0 0
    %158 = vmatprep.subr.bf16.mxu0 0
    %159 = vmatpush1.bf16.msra.mxu0 0
    %160 = vmatprep.subr.bf16.mxu0 0
    %161 = vmatpush1.bf16.msra.mxu0 0
    %162 = vmatprep.subr.bf16.mxu0 0
    %163 = vmatpush1.bf16.msra.mxu0 0
    %164 = vmatprep.subr.bf16.mxu0 0
    %165 = vmatpush1.bf16.msra.mxu0 0
    %166 = vmatprep.subr.bf16.mxu0 0
    %167 = vmatpush1.bf16.msra.mxu0 0
    %168 = vmatprep.subr.bf16.mxu0 0
    %169 = vmatpush1.bf16.msra.mxu0 0
    %170 = vmatprep.subr.bf16.mxu0 0
    %171 = vmatpush1.bf16.msra.mxu0 0
    %172 = vmatprep.mubr.bf16.mxu0 0
    %173 = vmatmul.mubr.bf16.gmra.mrb[0].mxu0 %v138
    %v174 = vpop.f32.mrb[0].mxu0
    %v175 = vadd.f32 %v128, %v174
    %v176 = vpop.f32.mrb[0].mxu0
    %v177 = vpop.f32.mrb[0].mxu0
    %v178 = vpop.f32.mrb[0].mxu0
    %179 = vdwg.mxu0
    %v180 = vmul.f32 %v175, 0.5
    %v181 = vtanh.pop %v180
    %v182 = vadd.f32 %v181, 1.0
    %v183 = vmul.f32 %v180, %v182
    %v184 = vpack.c.bf16 %v183, %v183
    %v185 = vld [vmem:[#allocation6] sm:$0xf]
    %v186 = vld [vmem:[#allocation6 + $0x4] sm:$0xf]
    %v187 = vld [vmem:[#allocation6 + $0x8] sm:$0xf]
    %v188 = vld [vmem:[#allocation6 + $0xc] sm:$0xf]
    %v189 = vld [vmem:[#allocation6 + $0x10] sm:$0xf]
    %v190 = vld [vmem:[#allocation6 + $0x14] sm:$0xf]
    %v191 = vld [vmem:[#allocation6 + $0x18] sm:$0xf]
    %v192 = vld [vmem:[#allocation6 + $0x1c] sm:$0xf]
    %v193 = vld [vmem:[#allocation6 + $0x20] sm:$0xf]
    %v194 = vld [vmem:[#allocation6 + $0x24] sm:$0xf]
    %v195 = vld [vmem:[#allocation6 + $0x28] sm:$0xf]
    %v196 = vld [vmem:[#allocation6 + $0x2c] sm:$0xf]
    %v197 = vld [vmem:[#allocation6 + $0x30] sm:$0xf]
    %v198 = vld [vmem:[#allocation6 + $0x34] sm:$0xf]
    %v199 = vld [vmem:[#allocation6 + $0x38] sm:$0xf]
    %v200 = vld [vmem:[#allocation6 + $0x3c] sm:$0xf]
    %v201 = vld [vmem:[%s4] sm:$0x1]
    %v203 = vlaneseq
    %v204 = vshrl.u32 %v203, 7
    %v205 = vsub.s32 0, %v204
    %v206 = vrot.slane %v201, %v205
    %v224 = vunpack.c.l.b16 %v185
    %v225 = vunpack.c.l.b16 %v186
    %v226 = vunpack.c.l.b16 %v187
    %v227 = vunpack.c.l.b16 %v188
    %v228 = vunpack.c.l.b16 %v189
    %v229 = vunpack.c.l.b16 %v190
    %v230 = vunpack.c.l.b16 %v191
    %v231 = vunpack.c.l.b16 %v192
    %v232 = vunpack.c.l.b16 %v193
    %v233 = vunpack.c.l.b16 %v194
    %v234 = vunpack.c.l.b16 %v195
    %v235 = vunpack.c.l.b16 %v196
    %v236 = vunpack.c.l.b16 %v197
    %v237 = vunpack.c.l.b16 %v198
    %v238 = vunpack.c.l.b16 %v199
    %v239 = vunpack.c.l.b16 %v200
    %v240 = vpack.c.b16 %v225, %v224
    %v241 = vpack.c.b16 %v227, %v226
    %v242 = vpack.c.b16 %v229, %v228
    %v243 = vpack.c.b16 %v231, %v230
    %v244 = vpack.c.b16 %v233, %v232
    %v245 = vpack.c.b16 %v235, %v234
    %v246 = vpack.c.b16 %v237, %v236
    %v247 = vpack.c.b16 %v239, %v238
    %256 = vmatprep.subr.bf16.mxu0 0
    %257 = vmatpush1.bf16.msra.mxu0 %v240
    %258 = vmatprep.subr.bf16.mxu0 0
    %259 = vmatpush1.bf16.msra.mxu0 %v241
    %260 = vmatprep.subr.bf16.mxu0 0
    %261 = vmatpush1.bf16.msra.mxu0 %v242
    %262 = vmatprep.subr.bf16.mxu0 0
    %263 = vmatpush1.bf16.msra.mxu0 %v243
    %264 = vmatprep.subr.bf16.mxu0 0
    %265 = vmatpush1.bf16.msra.mxu0 %v244
    %266 = vmatprep.subr.bf16.mxu0 0
    %267 = vmatpush1.bf16.msra.mxu0 %v245
    %268 = vmatprep.subr.bf16.mxu0 0
    %269 = vmatpush1.bf16.msra.mxu0 %v246
    %270 = vmatprep.subr.bf16.mxu0 0
    %271 = vmatpush1.bf16.msra.mxu0 %v247
    %272 = vmatprep.subr.bf16.mxu0 0
    %273 = vmatpush1.bf16.msra.mxu0 0
    %274 = vmatprep.subr.bf16.mxu0 0
    %275 = vmatpush1.bf16.msra.mxu0 0
    %276 = vmatprep.subr.bf16.mxu0 0
    %277 = vmatpush1.bf16.msra.mxu0 0
    %278 = vmatprep.subr.bf16.mxu0 0
    %279 = vmatpush1.bf16.msra.mxu0 0
    %280 = vmatprep.subr.bf16.mxu0 0
    %281 = vmatpush1.bf16.msra.mxu0 0
    %282 = vmatprep.subr.bf16.mxu0 0
    %283 = vmatpush1.bf16.msra.mxu0 0
    %284 = vmatprep.subr.bf16.mxu0 0
    %285 = vmatpush1.bf16.msra.mxu0 0
    %286 = vmatprep.subr.bf16.mxu0 0
    %287 = vmatpush1.bf16.msra.mxu0 0
    %288 = vmatprep.mubr.bf16.mxu0 0
    %289 = vmatmul.mubr.bf16.gmra.mrb[0].mxu0 %v184
    %v290 = vpop.f32.mrb[0].mxu0
    %v291 = vadd.f32 %v206, %v290
    %v292 = vpop.f32.mrb[0].mxu0
    %v293 = vpop.f32.mrb[0].mxu0
    %v294 = vpop.f32.mrb[0].mxu0
    %295 = vdwg.mxu0
    %v296 = vmul.f32 %v291, 0.5
    %v297 = vtanh.pop %v296
    %v298 = vadd.f32 %v297, 1.0
    %v299 = vmul.f32 %v296, %v298
    %v300 = vpack.c.bf16 %v299, %v299
    %v301 = vld [vmem:[#allocation7] sm:$0xf]
    %v302 = vld [vmem:[#allocation7 + $0x4] sm:$0xf]
    %v303 = vld [vmem:[#allocation7 + $0x8] sm:$0xf]
    %v304 = vld [vmem:[#allocation7 + $0xc] sm:$0xf]
    %v305 = vld [vmem:[#allocation7 + $0x10] sm:$0xf]
    %v306 = vld [vmem:[#allocation7 + $0x14] sm:$0xf]
    %v307 = vld [vmem:[#allocation7 + $0x18] sm:$0xf]
    %v308 = vld [vmem:[#allocation7 + $0x1c] sm:$0xf]
    %v309 = vld [vmem:[#allocation7 + $0x20] sm:$0xf]
    %v310 = vld [vmem:[#allocation7 + $0x24] sm:$0xf]
    %v311 = vld [vmem:[#allocation7 + $0x28] sm:$0xf]
    %v312 = vld [vmem:[#allocation7 + $0x2c] sm:$0xf]
    %v313 = vld [vmem:[#allocation7 + $0x30] sm:$0xf]
    %v314 = vld [vmem:[#allocation7 + $0x34] sm:$0xf]
    %v315 = vld [vmem:[#allocation7 + $0x38] sm:$0xf]
    %v316 = vld [vmem:[#allocation7 + $0x3c] sm:$0xf]
    %v317 = vld [vmem:[%s6] sm:$0x1]
    %v319 = vlaneseq
    %v320 = vshrl.u32 %v319, 7
    %v321 = vsub.s32 0, %v320
    %v322 = vrot.slane %v317, %v321
    %v340 = vunpack.c.l.b16 %v301
    %v341 = vunpack.c.l.b16 %v302
    %v342 = vunpack.c.l.b16 %v303
    %v343 = vunpack.c.l.b16 %v304
    %v344 = vunpack.c.l.b16 %v305
    %v345 = vunpack.c.l.b16 %v306
    %v346 = vunpack.c.l.b16 %v307
    %v347 = vunpack.c.l.b16 %v308
    %v348 = vunpack.c.l.b16 %v309
    %v349 = vunpack.c.l.b16 %v310
    %v350 = vunpack.c.l.b16 %v311
    %v351 = vunpack.c.l.b16 %v312
    %v352 = vunpack.c.l.b16 %v313
    %v353 = vunpack.c.l.b16 %v314
    %v354 = vunpack.c.l.b16 %v315
    %v355 = vunpack.c.l.b16 %v316
    %v356 = vpack.c.b16 %v341, %v340
    %v357 = vpack.c.b16 %v343, %v342
    %v358 = vpack.c.b16 %v345, %v344
    %v359 = vpack.c.b16 %v347, %v346
    %v360 = vpack.c.b16 %v349, %v348
    %v361 = vpack.c.b16 %v351, %v350
    %v362 = vpack.c.b16 %v353, %v352
    %v363 = vpack.c.b16 %v355, %v354
    %372 = vmatprep.subr.bf16.mxu0 0
    %373 = vmatpush1.bf16.msra.mxu0 %v356
    %374 = vmatprep.subr.bf16.mxu0 0
    %375 = vmatpush1.bf16.msra.mxu0 %v357
    %376 = vmatprep.subr.bf16.mxu0 0
    %377 = vmatpush1.bf16.msra.mxu0 %v358
    %378 = vmatprep.subr.bf16.mxu0 0
    %379 = vmatpush1.bf16.msra.mxu0 %v359
    %380 = vmatprep.subr.bf16.mxu0 0
    %381 = vmatpush1.bf16.msra.mxu0 %v360
    %382 = vmatprep.subr.bf16.mxu0 0
    %383 = vmatpush1.bf16.msra.mxu0 %v361
    %384 = vmatprep.subr.bf16.mxu0 0
    %385 = vmatpush1.bf16.msra.mxu0 %v362
    %386 = vmatprep.subr.bf16.mxu0 0
    %387 = vmatpush1.bf16.msra.mxu0 %v363
    %388 = vmatprep.subr.bf16.mxu0 0
    %389 = vmatpush1.bf16.msra.mxu0 0
    %390 = vmatprep.subr.bf16.mxu0 0
    %391 = vmatpush1.bf16.msra.mxu0 0
    %392 = vmatprep.subr.bf16.mxu0 0
    %393 = vmatpush1.bf16.msra.mxu0 0
    %394 = vmatprep.subr.bf16.mxu0 0
    %395 = vmatpush1.bf16.msra.mxu0 0
    %396 = vmatprep.subr.bf16.mxu0 0
    %397 = vmatpush1.bf16.msra.mxu0 0
    %398 = vmatprep.subr.bf16.mxu0 0
    %399 = vmatpush1.bf16.msra.mxu0 0
    %400 = vmatprep.subr.bf16.mxu0 0
    %401 = vmatpush1.bf16.msra.mxu0 0
    %402 = vmatprep.subr.bf16.mxu0 0
    %403 = vmatpush1.bf16.msra.mxu0 0
    %404 = vmatprep.mubr.bf16.mxu0 0
    %405 = vmatmul.mubr.bf16.gmra.mrb[0].mxu0 %v300
    %v406 = vpop.f32.mrb[0].mxu0
    %v407 = vadd.f32 %v322, %v406
    %v408 = vpop.f32.mrb[0].mxu0
    %v409 = vpop.f32.mrb[0].mxu0
    %v410 = vpop.f32.mrb[0].mxu0
    %411 = vdwg.mxu0
    %v412 = vmul.f32 %v407, 0.5
    %v413 = vtanh.pop %v412
    %v414 = vadd.f32 %v413, 1.0
    %v415 = vmul.f32 %v412, %v414
    %v416 = vpack.c.bf16 %v415, %v415
    %v417 = vld [vmem:[#allocation9] sm:$0xf]
    %v418 = vld [vmem:[#allocation9 + $0x4] sm:$0xf]
    %v419 = vld [vmem:[#allocation9 + $0x8] sm:$0xf]
    %v420 = vld [vmem:[#allocation9 + $0xc] sm:$0xf]
    %v421 = vld [vmem:[#allocation9 + $0x10] sm:$0xf]
    %v422 = vld [vmem:[#allocation9 + $0x14] sm:$0xf]
    %v423 = vld [vmem:[#allocation9 + $0x18] sm:$0xf]
    %v424 = vld [vmem:[#allocation9 + $0x1c] sm:$0xf]
    %v425 = vld [vmem:[#allocation9 + $0x20] sm:$0xf]
    %v426 = vld [vmem:[#allocation9 + $0x24] sm:$0xf]
    %v427 = vld [vmem:[#allocation9 + $0x28] sm:$0xf]
    %v428 = vld [vmem:[#allocation9 + $0x2c] sm:$0xf]
    %v429 = vld [vmem:[#allocation9 + $0x30] sm:$0xf]
    %v430 = vld [vmem:[#allocation9 + $0x34] sm:$0xf]
    %v431 = vld [vmem:[#allocation9 + $0x38] sm:$0xf]
    %v432 = vld [vmem:[#allocation9 + $0x3c] sm:$0xf]
    %v433 = vld [vmem:[%s8] sm:$0x1]
    %v435 = vlaneseq
    %v436 = vshrl.u32 %v435, 7
    %v437 = vsub.s32 0, %v436
    %v438 = vrot.slane %v433, %v437
    %v456 = vunpack.c.l.b16 %v417
    %v457 = vunpack.c.l.b16 %v418
    %v458 = vunpack.c.l.b16 %v419
    %v459 = vunpack.c.l.b16 %v420
    %v460 = vunpack.c.l.b16 %v421
    %v461 = vunpack.c.l.b16 %v422
    %v462 = vunpack.c.l.b16 %v423
    %v463 = vunpack.c.l.b16 %v424
    %v464 = vunpack.c.l.b16 %v425
    %v465 = vunpack.c.l.b16 %v426
    %v466 = vunpack.c.l.b16 %v427
    %v467 = vunpack.c.l.b16 %v428
    %v468 = vunpack.c.l.b16 %v429
    %v469 = vunpack.c.l.b16 %v430
    %v470 = vunpack.c.l.b16 %v431
    %v471 = vunpack.c.l.b16 %v432
    %v472 = vpack.c.b16 %v457, %v456
    %v473 = vpack.c.b16 %v459, %v458
    %v474 = vpack.c.b16 %v461, %v460
    %v475 = vpack.c.b16 %v463, %v462
    %v476 = vpack.c.b16 %v465, %v464
    %v477 = vpack.c.b16 %v467, %v466
    %v478 = vpack.c.b16 %v469, %v468
    %v479 = vpack.c.b16 %v471, %v470
    %488 = vmatprep.subr.bf16.mxu0 0
    %489 = vmatpush1.bf16.msra.mxu0 %v472
    %490 = vmatprep.subr.bf16.mxu0 0
    %491 = vmatpush1.bf16.msra.mxu0 %v473
    %492 = vmatprep.subr.bf16.mxu0 0
    %493 = vmatpush1.bf16.msra.mxu0 %v474
    %494 = vmatprep.subr.bf16.mxu0 0
    %495 = vmatpush1.bf16.msra.mxu0 %v475
    %496 = vmatprep.subr.bf16.mxu0 0
    %497 = vmatpush1.bf16.msra.mxu0 %v476
    %498 = vmatprep.subr.bf16.mxu0 0
    %499 = vmatpush1.bf16.msra.mxu0 %v477
    %500 = vmatprep.subr.bf16.mxu0 0
    %501 = vmatpush1.bf16.msra.mxu0 %v478
    %502 = vmatprep.subr.bf16.mxu0 0
    %503 = vmatpush1.bf16.msra.mxu0 %v479
    %504 = vmatprep.subr.bf16.mxu0 0
    %505 = vmatpush1.bf16.msra.mxu0 0
    %506 = vmatprep.subr.bf16.mxu0 0
    %507 = vmatpush1.bf16.msra.mxu0 0
    %508 = vmatprep.subr.bf16.mxu0 0
    %509 = vmatpush1.bf16.msra.mxu0 0
    %510 = vmatprep.subr.bf16.mxu0 0
    %511 = vmatpush1.bf16.msra.mxu0 0
    %512 = vmatprep.subr.bf16.mxu0 0
    %513 = vmatpush1.bf16.msra.mxu0 0
    %514 = vmatprep.subr.bf16.mxu0 0
    %515 = vmatpush1.bf16.msra.mxu0 0
    %516 = vmatprep.subr.bf16.mxu0 0
    %517 = vmatpush1.bf16.msra.mxu0 0
    %518 = vmatprep.subr.bf16.mxu0 0
    %519 = vmatpush1.bf16.msra.mxu0 0
    %520 = vmatprep.mubr.bf16.mxu0 0
    %521 = vmatmul.mubr.bf16.gmra.mrb[0].mxu0 %v416
    %v522 = vpop.f32.mrb[0].mxu0
    %v523 = vadd.f32 %v438, %v522
    %v524 = vpop.f32.mrb[0].mxu0
    %v525 = vpop.f32.mrb[0].mxu0
    %v526 = vpop.f32.mrb[0].mxu0
    %527 = vdwg.mxu0
    %v528 = vmul.f32 %v523, 0.5
    %v529 = vtanh.pop %v528
    %v530 = vadd.f32 %v529, 1.0
    %v531 = vmul.f32 %v528, %v530
    %v532 = vpack.c.bf16 %v531, %v531
    %v533 = vld [vmem:[#allocation10] sm:$0xf]
    %v534 = vld [vmem:[#allocation10 + $0x4] sm:$0xf]
    %v535 = vld [vmem:[#allocation10 + $0x8] sm:$0xf]
    %v536 = vld [vmem:[#allocation10 + $0xc] sm:$0xf]
    %v537 = vld [vmem:[#allocation10 + $0x10] sm:$0xf]
    %v538 = vld [vmem:[#allocation10 + $0x14] sm:$0xf]
    %v539 = vld [vmem:[#allocation10 + $0x18] sm:$0xf]
    %v540 = vld [vmem:[#allocation10 + $0x1c] sm:$0xf]
    %v541 = vld [vmem:[#allocation10 + $0x20] sm:$0xf]
    %v542 = vld [vmem:[#allocation10 + $0x24] sm:$0xf]
    %v543 = vld [vmem:[#allocation10 + $0x28] sm:$0xf]
    %v544 = vld [vmem:[#allocation10 + $0x2c] sm:$0xf]
    %v545 = vld [vmem:[#allocation10 + $0x30] sm:$0xf]
    %v546 = vld [vmem:[#allocation10 + $0x34] sm:$0xf]
    %v547 = vld [vmem:[#allocation10 + $0x38] sm:$0xf]
    %v548 = vld [vmem:[#allocation10 + $0x3c] sm:$0xf]
    %v549 = vld [vmem:[%s10] sm:$0x1]
    %v551 = vlaneseq
    %v552 = vshrl.u32 %v551, 7
    %v553 = vsub.s32 0, %v552
    %v554 = vrot.slane %v549, %v553
    %v572 = vunpack.c.l.b16 %v533
    %v573 = vunpack.c.l.b16 %v534
    %v574 = vunpack.c.l.b16 %v535
    %v575 = vunpack.c.l.b16 %v536
    %v576 = vunpack.c.l.b16 %v537
    %v577 = vunpack.c.l.b16 %v538
    %v578 = vunpack.c.l.b16 %v539
    %v579 = vunpack.c.l.b16 %v540
    %v580 = vunpack.c.l.b16 %v541
    %v581 = vunpack.c.l.b16 %v542
    %v582 = vunpack.c.l.b16 %v543
    %v583 = vunpack.c.l.b16 %v544
    %v584 = vunpack.c.l.b16 %v545
    %v585 = vunpack.c.l.b16 %v546
    %v586 = vunpack.c.l.b16 %v547
    %v587 = vunpack.c.l.b16 %v548
    %v588 = vpack.c.b16 %v573, %v572
    %v589 = vpack.c.b16 %v575, %v574
    %v590 = vpack.c.b16 %v577, %v576
    %v591 = vpack.c.b16 %v579, %v578
    %v592 = vpack.c.b16 %v581, %v580
    %v593 = vpack.c.b16 %v583, %v582
    %v594 = vpack.c.b16 %v585, %v584
    %v595 = vpack.c.b16 %v587, %v586
    %604 = vmatprep.subr.bf16.mxu0 0
    %605 = vmatpush1.bf16.msra.mxu0 %v588
    %606 = vmatprep.subr.bf16.mxu0 0
    %607 = vmatpush1.bf16.msra.mxu0 %v589
    %608 = vmatprep.subr.bf16.mxu0 0
    %609 = vmatpush1.bf16.msra.mxu0 %v590
    %610 = vmatprep.subr.bf16.mxu0 0
    %611 = vmatpush1.bf16.msra.mxu0 %v591
    %612 = vmatprep.subr.bf16.mxu0 0
    %613 = vmatpush1.bf16.msra.mxu0 %v592
    %614 = vmatprep.subr.bf16.mxu0 0
    %615 = vmatpush1.bf16.msra.mxu0 %v593
    %616 = vmatprep.subr.bf16.mxu0 0
    %617 = vmatpush1.bf16.msra.mxu0 %v594
    %618 = vmatprep.subr.bf16.mxu0 0
    %619 = vmatpush1.bf16.msra.mxu0 %v595
    %620 = vmatprep.subr.bf16.mxu0 0
    %621 = vmatpush1.bf16.msra.mxu0 0
    %622 = vmatprep.subr.bf16.mxu0 0
    %623 = vmatpush1.bf16.msra.mxu0 0
    %624 = vmatprep.subr.bf16.mxu0 0
    %625 = vmatpush1.bf16.msra.mxu0 0
    %626 = vmatprep.subr.bf16.mxu0 0
    %627 = vmatpush1.bf16.msra.mxu0 0
    %628 = vmatprep.subr.bf16.mxu0 0
    %629 = vmatpush1.bf16.msra.mxu0 0
    %630 = vmatprep.subr.bf16.mxu0 0
    %631 = vmatpush1.bf16.msra.mxu0 0
    %632 = vmatprep.subr.bf16.mxu0 0
    %633 = vmatpush1.bf16.msra.mxu0 0
    %634 = vmatprep.subr.bf16.mxu0 0
    %635 = vmatpush1.bf16.msra.mxu0 0
    %636 = vmatprep.mubr.bf16.mxu0 0
    %637 = vmatmul.mubr.bf16.gmra.mrb[0].mxu0 %v532
    %v638 = vpop.f32.mrb[0].mxu0
    %v639 = vadd.f32 %v554, %v638
    %v640 = vpop.f32.mrb[0].mxu0
    %v641 = vpop.f32.mrb[0].mxu0
    %v642 = vpop.f32.mrb[0].mxu0
    %643 = vdwg.mxu0
    %644 = vst [vmem:[%s11] sm:$0xff] %v639
    // Predicated region
    $region70: #{_forward_prepared.1} parent=1 // pred_check
      _
    $region71: #{_forward_prepared.1} parent=1 // pred_check_branch
      %646 = sbr.rel (0) target = $region73
    $region72: #{_forward_prepared.1} parent=1 // pred_region
      _
    $region73: #{_forward_prepared.1} parent=1 // pred_fallthru
      _
    // Predicated region
    $region74: #{_forward_prepared.1} parent=1 // pred_check
      _
    $region75: #{_forward_prepared.1} parent=1 // pred_check_branch
      %648 = sbr.rel (0) target = $region77
    $region76: #{_forward_prepared.1} parent=1 // pred_region
      _
    $region77: #{_forward_prepared.1} parent=1 // pred_fallthru
      _
    %649 = vsyncpa [#allocation3], 1
    %650 = vsyncpa [#allocation5], 1
    %651 = vsyncpa [#allocation8], 1
    %652 = vsyncpa [#allocation11], 1

</llo_original>
